<compile_context>
chip_gen: v5e
topology: v5e:2x2
jax: 0.10.0
libtpu: 0.0.40
codegen_flags: <defaults>
</compile_context>

<pallas_src>
import functools

import jax
import jax.numpy as jnp
from jax import lax
from jax.experimental import pallas as pl
from jax.experimental.pallas import tpu as pltpu


def _contrastive_loss_kernel(im_ref, s_ref, diag_col_ref, diag_row_ref,
                             ids_col_ref, ids_row_ref, out_ref, colmax_ref,
                             *, margin, max_violation):
    i = pl.program_id(0)
    last = pl.num_programs(0) - 1

    @pl.when(i == 0)
    def _init():
        out_ref[0, 0] = 0.0
        if max_violation:
            colmax_ref[...] = jnp.zeros_like(colmax_ref)

    # (TM, B) score tile: contract on dim 1 of both operands -> no s.T copy.
    scores = lax.dot_general(
        im_ref[...], s_ref[...],
        dimension_numbers=(((1,), (1,)), ((), ())),
        preferred_element_type=jnp.float32,
    )

    d1 = diag_col_ref[...]                          # (TM, 1) diag for this row tile
    d2 = diag_row_ref[...]                          # (1,  B) full diagonal as a row
    mask = ids_col_ref[...] == ids_row_ref[...]     # (TM, B) repeated-image mask

    base = scores + margin                          # shared between both hinges
    cost_s = jnp.where(mask, 0.0, jnp.maximum(base - d1, 0.0))
    cost_im = jnp.where(mask, 0.0, jnp.maximum(base - d2, 0.0))

    if max_violation:
        # caption retrieval: hardest negative per image (all captions in-tile).
        row_max = jnp.max(cost_s, axis=1, keepdims=True)          # (TM, 1)
        out_ref[0, 0] += jnp.sum(row_max)
        # image retrieval: running hardest negative per caption across row tiles.
        colmax_ref[...] = jnp.maximum(
            colmax_ref[...], jnp.max(cost_im, axis=0, keepdims=True))

        @pl.when(i == last)
        def _finalize():
            out_ref[0, 0] += jnp.sum(colmax_ref[...])
    else:
        out_ref[0, 0] += jnp.sum(cost_s) + jnp.sum(cost_im)


def contrastive_loss(im, s, img_ids, *, margin=0.2, max_violation=False,
                     block_rows=256):
    """Pallas TPU implementation of ContrastiveLoss.forward."""
    B, D = im.shape
    assert s.shape == (B, D)

    # Row-tile size: use block_rows if it divides B, else fall back to one tile.
    tile_m = block_rows if (B % block_rows == 0) else B
    n_tiles = B // tile_m

    ids = img_ids.astype(jnp.int32)
    ids_col = ids.reshape(B, 1)
    ids_row = ids.reshape(1, B)

    # Diagonal of im @ s.T computed once as a cheap (B, D) elementwise reduce
    # (O(B*D), negligible vs the O(B^2*D) kernel); fed in as column + row.
    diag = jnp.sum(im.astype(jnp.float32) * s.astype(jnp.float32), axis=-1)
    diag_col = diag.reshape(B, 1)
    diag_row = diag.reshape(1, B)

    kernel = functools.partial(
        _contrastive_loss_kernel,
        margin=float(margin), max_violation=bool(max_violation))

    itemsize = jnp.dtype(im.dtype).itemsize
    cost = pl.CostEstimate(
        flops=2 * B * B * D,
        transcendentals=0,
        bytes_accessed=2 * B * D * itemsize + 4 * B * 4 + 4,
    )
    # Rough VMEM budget: resident s + double-buffered im tiles + f32 score block.
    vmem_est = (B * D * itemsize
                + 2 * tile_m * D * itemsize
                + 2 * tile_m * B * 4
                + 4 * B * 4)
    vmem_limit = int(min(max(2 * vmem_est, 16 * 2**20), 48 * 2**20))

    grid_spec = pltpu.PrefetchScalarGridSpec(
        num_scalar_prefetch=0,
        grid=(n_tiles,),
        in_specs=[
            pl.BlockSpec((tile_m, D), lambda i: (i, 0)),   # im  (row-tiled)
            pl.BlockSpec((B, D), lambda i: (0, 0)),        # s   (resident)
            pl.BlockSpec((tile_m, 1), lambda i: (i, 0)),   # diag column tile
            pl.BlockSpec((1, B), lambda i: (0, 0)),        # diag row (resident)
            pl.BlockSpec((tile_m, 1), lambda i: (i, 0)),   # ids column tile
            pl.BlockSpec((1, B), lambda i: (0, 0)),        # ids row (resident)
        ],
        out_specs=pl.BlockSpec(memory_space=pltpu.MemorySpace.SMEM),
        scratch_shapes=[pltpu.VMEM((1, B), jnp.float32)],  # running column max
    )

    out = pl.pallas_call(
        kernel,
        out_shape=jax.ShapeDtypeStruct((1, 1), jnp.float32),
        grid_spec=grid_spec,
        compiler_params=pltpu.CompilerParams(
            # The single grid axis reduces into the scalar accumulator.
            dimension_semantics=("arbitrary",),
            vmem_limit_bytes=vmem_limit,
        ),
        cost_estimate=cost,
    )(im, s, diag_col, diag_row, ids_col, ids_row)
    return out[0, 0]


def _reference_loss(im, s, img_ids, margin=0.2, max_violation=False):
    """Pure-JAX reference mirroring the PyTorch forward."""
    scores = im @ s.T
    diagonal = jnp.diag(scores).reshape(-1, 1)
    d1 = diagonal
    d2 = diagonal.T
    cost_s = jnp.maximum(margin + scores - d1, 0.0)
    cost_im = jnp.maximum(margin + scores - d2, 0.0)
    mask = img_ids[:, None] == img_ids[None, :]
    cost_s = jnp.where(mask, 0.0, cost_s)
    cost_im = jnp.where(mask, 0.0, cost_im)
    if max_violation:
        cost_s = cost_s.max(axis=1)
        cost_im = cost_im.max(axis=0)
    return cost_s.sum() + cost_im.sum()


if __name__ == "__main__":
    B, D = 16, 32
    key = jax.random.PRNGKey(0)
    k_im, k_s = jax.random.split(key)
    im = jax.random.normal(k_im, (B, D), dtype=jnp.float32)
    s = jax.random.normal(k_s, (B, D), dtype=jnp.float32)
    # deterministic img_ids with repeated pairs to exercise mask_repeat
    img_ids = jnp.array([0, 0, 1, 2, 3, 4, 5, 6, 7, 7, 8, 9, 10, 11, 12, 13],
                        dtype=jnp.int32)

    ok = True
    for mv in (False, True):
        # block_rows=8 -> 2-step grid: exercises accumulation + running col-max.
        loss = contrastive_loss(im, s, img_ids, margin=0.2, max_violation=mv,
                                block_rows=8)
        loss = jax.block_until_ready(loss)
        ref = _reference_loss(im, s, img_ids, margin=0.2, max_violation=mv)
        if not jnp.allclose(loss, ref, rtol=1e-4, atol=1e-4):
            ok = False
            print("MISMATCH", mv, float(loss), float(ref))

    if ok:
        print("KERNEL_OK")
</pallas_src>

<mosaic_0001>
module attributes {stable_mosaic.version = 11 : i64} {
  func.func @_contrastive_loss_kernel(%arg0: i32, %arg1: memref<8x32xf32, #tpu.memory_space<vmem>>, %arg2: memref<16x32xf32, #tpu.memory_space<vmem>>, %arg3: memref<8x1xf32, #tpu.memory_space<vmem>>, %arg4: memref<1x16xf32, #tpu.memory_space<vmem>>, %arg5: memref<8x1xi32, #tpu.memory_space<vmem>>, %arg6: memref<1x16xi32, #tpu.memory_space<vmem>>, %arg7: memref<1x1xf32, #tpu.memory_space<smem>>, %arg8: memref<1x16xf32, #tpu.memory_space<vmem>>) attributes {dimension_semantics = [#tpu.dimension_semantics<arbitrary>], iteration_bounds = array<i64: 2>, scalar_prefetch = 0 : i64, scratch_operands = 1 : i64, tpu.core_type = #tpu.core_type<tc>, window_params = [{transform_indices = @transform_0, window_bounds = array<i64: 8, 32>}, {pipeline_mode = #tpu.pipeline_mode<synchronous>, transform_indices = @transform_1, window_bounds = array<i64: 16, 32>}, {transform_indices = @transform_2, window_bounds = array<i64: 8, 1>}, {pipeline_mode = #tpu.pipeline_mode<synchronous>, transform_indices = @transform_3, window_bounds = array<i64: 1, 16>}, {transform_indices = @transform_4, window_bounds = array<i64: 8, 1>}, {pipeline_mode = #tpu.pipeline_mode<synchronous>, transform_indices = @transform_5, window_bounds = array<i64: 1, 16>}, {transform_indices = @transform_6, window_bounds = array<i64: 1, 1>}]} {
    %c0_i32 = arith.constant 0 : i32
    %0 = arith.cmpi eq, %arg0, %c0_i32 : i32
    %1 = arith.extui %0 : i1 to i32
    %c0_i32_0 = arith.constant 0 : i32
    %2 = arith.cmpi ne, %1, %c0_i32_0 : i32
    scf.if %2 {
      %cst_23 = arith.constant 0.000000e+00 : f32
      %c0_24 = arith.constant 0 : index
      %c0_25 = arith.constant 0 : index
      %39 = memref.load %arg7[%c0_24, %c0_25] : memref<1x1xf32, #tpu.memory_space<smem>>
      memref.store %cst_23, %arg7[%c0_24, %c0_25] : memref<1x1xf32, #tpu.memory_space<smem>>
    } else {
    }
    %c0 = arith.constant 0 : index
    %c0_1 = arith.constant 0 : index
    %3 = vector.load %arg1[%c0, %c0_1] : memref<8x32xf32, #tpu.memory_space<vmem>>, vector<8x32xf32>
    %c0_2 = arith.constant 0 : index
    %c0_3 = arith.constant 0 : index
    %4 = vector.load %arg2[%c0_2, %c0_3] : memref<16x32xf32, #tpu.memory_space<vmem>>, vector<16x32xf32>
    %cst = arith.constant dense<0.000000e+00> : vector<8x16xf32>
    %5 = tpu.matmul %3, %4, %cst {dimension_numbers = #tpu.dot_dimension_numbers<[1], [1], [0], [0], [0, 0, 1, 0], [], []>} : vector<8x32xf32>, vector<16x32xf32>, vector<8x16xf32> -> vector<8x16xf32>
    %c0_4 = arith.constant 0 : index
    %c0_5 = arith.constant 0 : index
    %6 = vector.load %arg3[%c0_4, %c0_5] : memref<8x1xf32, #tpu.memory_space<vmem>>, vector<8x1xf32>
    %c0_6 = arith.constant 0 : index
    %c0_7 = arith.constant 0 : index
    %7 = vector.load %arg4[%c0_6, %c0_7] : memref<1x16xf32, #tpu.memory_space<vmem>>, vector<1x16xf32>
    %c0_8 = arith.constant 0 : index
    %c0_9 = arith.constant 0 : index
    %8 = vector.load %arg5[%c0_8, %c0_9] : memref<8x1xi32, #tpu.memory_space<vmem>>, vector<8x1xi32>
    %c0_10 = arith.constant 0 : index
    %c0_11 = arith.constant 0 : index
    %9 = vector.load %arg6[%c0_10, %c0_11] : memref<1x16xi32, #tpu.memory_space<vmem>>, vector<1x16xi32>
    %10 = vector.broadcast %8 : vector<8x1xi32> to vector<8x16xi32>
    %11 = vector.broadcast %9 : vector<1x16xi32> to vector<8x16xi32>
    %12 = arith.cmpi eq, %10, %11 : vector<8x16xi32>
    %cst_12 = arith.constant 2.000000e-01 : f32
    %13 = vector.broadcast %cst_12 : f32 to vector<8x16xf32>
    %14 = arith.addf %5, %13 : vector<8x16xf32>
    %15 = vector.broadcast %6 : vector<8x1xf32> to vector<8x16xf32>
    %16 = arith.subf %14, %15 : vector<8x16xf32>
    %cst_13 = arith.constant 0.000000e+00 : f32
    %17 = vector.broadcast %cst_13 : f32 to vector<8x16xf32>
    %18 = arith.maximumf %16, %17 : vector<8x16xf32>
    %cst_14 = arith.constant 0.000000e+00 : f32
    %19 = vector.broadcast %cst_14 : f32 to vector<8x16xf32>
    %20 = arith.select %12, %19, %18 : vector<8x16xi1>, vector<8x16xf32>
    %21 = vector.broadcast %7 : vector<1x16xf32> to vector<8x16xf32>
    %22 = arith.subf %14, %21 : vector<8x16xf32>
    %cst_15 = arith.constant 0.000000e+00 : f32
    %23 = vector.broadcast %cst_15 : f32 to vector<8x16xf32>
    %24 = arith.maximumf %22, %23 : vector<8x16xf32>
    %cst_16 = arith.constant 0.000000e+00 : f32
    %25 = vector.broadcast %cst_16 : f32 to vector<8x16xf32>
    %26 = arith.select %12, %25, %24 : vector<8x16xi1>, vector<8x16xf32>
    %c0_17 = arith.constant 0 : index
    %c0_18 = arith.constant 0 : index
    %27 = memref.load %arg7[%c0_17, %c0_18] : memref<1x1xf32, #tpu.memory_space<smem>>
    %28 = vector.shape_cast %20 : vector<8x16xf32> to vector<1x8x16xf32>
    %cst_19 = arith.constant dense<0.000000e+00> : vector<1xf32>
    %29 = vector.multi_reduction <add>, %28, %cst_19 [1, 2] : vector<1x8x16xf32> to vector<1xf32>
    %30 = vector.shape_cast %29 : vector<1xf32> to vector<1x1x1xf32>
    %31 = vector.extract %30[0, 0, 0] : f32 from vector<1x1x1xf32>
    %32 = vector.shape_cast %26 : vector<8x16xf32> to vector<1x8x16xf32>
    %cst_20 = arith.constant dense<0.000000e+00> : vector<1xf32>
    %33 = vector.multi_reduction <add>, %32, %cst_20 [1, 2] : vector<1x8x16xf32> to vector<1xf32>
    %34 = vector.shape_cast %33 : vector<1xf32> to vector<1x1x1xf32>
    %35 = vector.extract %34[0, 0, 0] : f32 from vector<1x1x1xf32>
    %36 = arith.addf %31, %35 : f32
    %37 = arith.addf %27, %36 : f32
    %c0_21 = arith.constant 0 : index
    %c0_22 = arith.constant 0 : index
    %38 = memref.load %arg7[%c0_21, %c0_22] : memref<1x1xf32, #tpu.memory_space<smem>>
    memref.store %37, %arg7[%c0_21, %c0_22] : memref<1x1xf32, #tpu.memory_space<smem>>
    return
  }
  func.func @transform_0(%arg0: i32) -> (i32, i32) {
    %c0_i32 = arith.constant 0 : i32
    %c0_i32_0 = arith.constant 0 : i32
    return %arg0, %c0_i32 : i32, i32
  }
  func.func @transform_1(%arg0: i32) -> (i32, i32) {
    %c0_i32 = arith.constant 0 : i32
    %c0_i32_0 = arith.constant 0 : i32
    %c0_i32_1 = arith.constant 0 : i32
    return %c0_i32, %c0_i32_0 : i32, i32
  }
  func.func @transform_2(%arg0: i32) -> (i32, i32) {
    %c0_i32 = arith.constant 0 : i32
    %c0_i32_0 = arith.constant 0 : i32
    return %arg0, %c0_i32 : i32, i32
  }
  func.func @transform_3(%arg0: i32) -> (i32, i32) {
    %c0_i32 = arith.constant 0 : i32
    %c0_i32_0 = arith.constant 0 : i32
    %c0_i32_1 = arith.constant 0 : i32
    return %c0_i32, %c0_i32_0 : i32, i32
  }
  func.func @transform_4(%arg0: i32) -> (i32, i32) {
    %c0_i32 = arith.constant 0 : i32
    %c0_i32_0 = arith.constant 0 : i32
    return %arg0, %c0_i32 : i32, i32
  }
  func.func @transform_5(%arg0: i32) -> (i32, i32) {
    %c0_i32 = arith.constant 0 : i32
    %c0_i32_0 = arith.constant 0 : i32
    %c0_i32_1 = arith.constant 0 : i32
    return %c0_i32, %c0_i32_0 : i32, i32
  }
  func.func @transform_6(%arg0: i32) -> (i32, i32) {
    %c0_i32 = arith.constant 0 : i32
    %c0_i32_0 = arith.constant 0 : i32
    %c0_i32_1 = arith.constant 0 : i32
    return %c0_i32, %c0_i32_0 : i32, i32
  }
}

</mosaic_0001>

<llo_original>
// kernel: tpu_custom_call.1
$region0: #{tpu_custom_call.1}
  #allocation0 [shape = 'u32[]', space=smem, size = 0x4, offset = 0x4, fixed_abs, tag = 'smem constant byte address 0x4 - core index']
  #allocation1 [shape = 'u32[72,128]{1,0:T(1,128)}', space=vmem, size = 0x9000, scoped, tag = 'internal scratch']
  #allocation2 [shape = 'f32[1,16]{1,0:T(1,128)}', space=vmem, size = 0x200, scoped, tag = 'scratch operand']
  %s0 = inlined_call_operand.vmem [shape: f32[16,32], index: 0, kind: input, shape index: {}]
  %s1 = inlined_call_operand.vmem [shape: f32[16,32], index: 1, kind: input, shape index: {}]
  %s2 = inlined_call_operand.vmem [shape: f32[16,1], index: 2, kind: input, shape index: {}]
  %s3 = inlined_call_operand.vmem [shape: f32[1,16], index: 3, kind: input, shape index: {}]
  %s4 = inlined_call_operand.vmem [shape: s32[16,1], index: 4, kind: input, shape index: {}]
  %s5 = inlined_call_operand.vmem [shape: s32[1,16], index: 5, kind: input, shape index: {}]
  %s6 = inlined_call_operand.hbm [shape: f32[1,1], index: 6, kind: output, shape index: {}]
  %s7 = sld [smem:[#allocation0]]
  $region61: #{tpu_custom_call.1} parent=0
    _
  %s9 = ssub.s32 1, %s7
  %s10 = scalar_select 0, %s9, %s7
  $region1: #{tpu_custom_call.1} parent=0
    #allocation3 [shape = 'u8[512]{0}', space=smem, size = 0x200, scoped, tag = 'output window, operand 0, single buffered']
    #allocation4 [shape = 's32[2]{0}', space=sflag, size = 0x8, scoped, tag = 'scoped memory for tpu_custom_call.1']
    %11 = vsyncpa [#allocation4], 0
    loop: start=0, step=1, limit=4
    $region2: #{tpu_custom_call.1} parent=1 // loop_pre_header
      _
    $region3: #{tpu_custom_call.1} parent=1 // loop_header
      %s13 = sphi 0, %s17
      %p14 = scmp.ge.s32.totalorder %s13, 4
      %s23 = sphi 0, %s25
      %s26 = sphi 0, %s23
      %s27 = sphi 0, %s26
      %s43 = sphi 0, %s27
      %s47 = sphi 0, %s47
      %s49 = sphi 0, %s47
      %s50 = sphi 0, %s49
      %s64 = sphi 0, %s50
      %s70 = sphi 0, %s72
      %s73 = sphi 0, %s70
      %s74 = sphi 0, %s73
      %s90 = sphi 0, %s74
      %s94 = sphi 0, %s94
      %s96 = sphi 0, %s94
      %s97 = sphi 0, %s96
      %s111 = sphi 0, %s97
      %s117 = sphi 0, %s119
      %s120 = sphi 0, %s117
      %s121 = sphi 0, %s120
      %s137 = sphi 0, %s121
      %s141 = sphi 0, %s141
      %s143 = sphi 0, %s141
      %s144 = sphi 0, %s143
      %s158 = sphi 0, %s144
      %s162 = sphi 0, %s162
      %s164 = sphi 0, %s162
      %s165 = sphi 0, %s164
      %s179 = sphi 0, %s165
    $region4: #{tpu_custom_call.1} parent=1 // loop_header_branch
      %16 = sbr.rel (%p14) target = $region8
    $region5: #{tpu_custom_call.1} parent=1 // loop_body
      %s18 = ssub.s32 %s13, 1
      %s19 = ssub.s32 %s13, 2
      %s20 = sadd.s32 %s13, 1
      %s21 = ssub.s32 %s13, %s20
      %p22 = scmp.eq.s32.totalorder %s21, 0
      %s24 = sadd.s32 %s23, 1
      %s25 = scalar_select %p22, %s23, %s24
      %p28 = pneg %p22
      %p29 = scmp.eq.s32.totalorder %s13, 1
      %p30 = por %p28, %p29
      %p31 = scmp.ne.s32.totalorder %s23, %s26
      %p32 = scmp.eq.s32.totalorder %s13, 0
      %p33 = por %p31, %p32
      %p34 = scmp.ne.s32.totalorder %s23, %s26
      %p35 = scmp.eq.s32.totalorder %s18, 1
      %p36 = por %p34, %p35
      %p37 = scmp.ne.s32.totalorder %s26, %s27
      %p38 = scmp.eq.s32.totalorder %s18, 0
      %p39 = por %p37, %p38
      %p40 = scmp.ne.s32.totalorder %s26, %s27
      %p41 = scmp.eq.s32.totalorder %s19, 1
      %p42 = por %p40, %p41
      %p44 = scmp.ne.s32.totalorder %s27, %s43
      %p45 = scmp.eq.s32.totalorder %s19, 0
      %p46 = por %p44, %p45
      %s48 = sadd.s32 %s47, 1
      %p51 = scmp.eq.s32.totalorder %s13, 1
      %p52 = scmp.ne.s32.totalorder %s47, %s49
      %p53 = scmp.eq.s32.totalorder %s13, 0
      %p54 = por %p52, %p53
      %p55 = scmp.ne.s32.totalorder %s47, %s49
      %p56 = scmp.eq.s32.totalorder %s18, 1
      %p57 = por %p55, %p56
      %p58 = scmp.ne.s32.totalorder %s49, %s50
      %p59 = scmp.eq.s32.totalorder %s18, 0
      %p60 = por %p58, %p59
      %p61 = scmp.ne.s32.totalorder %s49, %s50
      %p62 = scmp.eq.s32.totalorder %s19, 1
      %p63 = por %p61, %p62
      %p65 = scmp.ne.s32.totalorder %s50, %s64
      %p66 = scmp.eq.s32.totalorder %s19, 0
      %p67 = por %p65, %p66
      %s68 = ssub.s32 %s13, %s20
      %p69 = scmp.eq.s32.totalorder %s68, 0
      %s71 = sadd.s32 %s70, 1
      %s72 = scalar_select %p69, %s70, %s71
      %p75 = pneg %p69
      %p76 = scmp.eq.s32.totalorder %s13, 1
      %p77 = por %p75, %p76
      %p78 = scmp.ne.s32.totalorder %s70, %s73
      %p79 = scmp.eq.s32.totalorder %s13, 0
      %p80 = por %p78, %p79
      %p81 = scmp.ne.s32.totalorder %s70, %s73
      %p82 = scmp.eq.s32.totalorder %s18, 1
      %p83 = por %p81, %p82
      %p84 = scmp.ne.s32.totalorder %s73, %s74
      %p85 = scmp.eq.s32.totalorder %s18, 0
      %p86 = por %p84, %p85
      %p87 = scmp.ne.s32.totalorder %s73, %s74
      %p88 = scmp.eq.s32.totalorder %s19, 1
      %p89 = por %p87, %p88
      %p91 = scmp.ne.s32.totalorder %s74, %s90
      %p92 = scmp.eq.s32.totalorder %s19, 0
      %p93 = por %p91, %p92
      %s95 = sadd.s32 %s94, 1
      %p98 = scmp.eq.s32.totalorder %s13, 1
      %p99 = scmp.ne.s32.totalorder %s94, %s96
      %p100 = scmp.eq.s32.totalorder %s13, 0
      %p101 = por %p99, %p100
      %p102 = scmp.ne.s32.totalorder %s94, %s96
      %p103 = scmp.eq.s32.totalorder %s18, 1
      %p104 = por %p102, %p103
      %p105 = scmp.ne.s32.totalorder %s96, %s97
      %p106 = scmp.eq.s32.totalorder %s18, 0
      %p107 = por %p105, %p106
      %p108 = scmp.ne.s32.totalorder %s96, %s97
      %p109 = scmp.eq.s32.totalorder %s19, 1
      %p110 = por %p108, %p109
      %p112 = scmp.ne.s32.totalorder %s97, %s111
      %p113 = scmp.eq.s32.totalorder %s19, 0
      %p114 = por %p112, %p113
      %s115 = ssub.s32 %s13, %s20
      %p116 = scmp.eq.s32.totalorder %s115, 0
      %s118 = sadd.s32 %s117, 1
      %s119 = scalar_select %p116, %s117, %s118
      %p122 = pneg %p116
      %p123 = scmp.eq.s32.totalorder %s13, 1
      %p124 = por %p122, %p123
      %p125 = scmp.ne.s32.totalorder %s117, %s120
      %p126 = scmp.eq.s32.totalorder %s13, 0
      %p127 = por %p125, %p126
      %p128 = scmp.ne.s32.totalorder %s117, %s120
      %p129 = scmp.eq.s32.totalorder %s18, 1
      %p130 = por %p128, %p129
      %p131 = scmp.ne.s32.totalorder %s120, %s121
      %p132 = scmp.eq.s32.totalorder %s18, 0
      %p133 = por %p131, %p132
      %p134 = scmp.ne.s32.totalorder %s120, %s121
      %p135 = scmp.eq.s32.totalorder %s19, 1
      %p136 = por %p134, %p135
      %p138 = scmp.ne.s32.totalorder %s121, %s137
      %p139 = scmp.eq.s32.totalorder %s19, 0
      %p140 = por %p138, %p139
      %s142 = sadd.s32 %s141, 1
      %p145 = scmp.eq.s32.totalorder %s13, 1
      %p146 = scmp.ne.s32.totalorder %s141, %s143
      %p147 = scmp.eq.s32.totalorder %s13, 0
      %p148 = por %p146, %p147
      %p149 = scmp.ne.s32.totalorder %s141, %s143
      %p150 = scmp.eq.s32.totalorder %s18, 1
      %p151 = por %p149, %p150
      %p152 = scmp.ne.s32.totalorder %s143, %s144
      %p153 = scmp.eq.s32.totalorder %s18, 0
      %p154 = por %p152, %p153
      %p155 = scmp.ne.s32.totalorder %s143, %s144
      %p156 = scmp.eq.s32.totalorder %s19, 1
      %p157 = por %p155, %p156
      %p159 = scmp.ne.s32.totalorder %s144, %s158
      %p160 = scmp.eq.s32.totalorder %s19, 0
      %p161 = por %p159, %p160
      %s163 = sadd.s32 %s162, 1
      %p166 = scmp.eq.s32.totalorder %s13, 1
      %p167 = scmp.ne.s32.totalorder %s162, %s164
      %p168 = scmp.eq.s32.totalorder %s13, 0
      %p169 = por %p167, %p168
      %p170 = scmp.ne.s32.totalorder %s162, %s164
      %p171 = scmp.eq.s32.totalorder %s18, 1
      %p172 = por %p170, %p171
      %p173 = scmp.ne.s32.totalorder %s164, %s165
      %p174 = scmp.eq.s32.totalorder %s18, 0
      %p175 = por %p173, %p174
      %p176 = scmp.ne.s32.totalorder %s164, %s165
      %p177 = scmp.eq.s32.totalorder %s19, 1
      %p178 = por %p176, %p177
      %p180 = scmp.ne.s32.totalorder %s165, %s179
      %p181 = scmp.eq.s32.totalorder %s19, 0
      %p182 = por %p180, %p181
      %p183 = scmp.le.s32.totalorder 1, %s13
      %p184 = scmp.lt.s32.totalorder %s13, 3
      %p185 = pnand %p183, %p184
      %p186 = pneg %p185
      // Predicated region
      $region9: #{tpu_custom_call.1} parent=5 // pred_check
        _
      $region10: #{tpu_custom_call.1} parent=5 // pred_check_branch
        %188 = sbr.rel (%p185) target = $region12
      $region11: #{tpu_custom_call.1} parent=5 // pred_region
        %s189 = ssub.s32 %s13, 1
        // Predicated region
        $region13: #{tpu_custom_call.1} parent=11 // pred_check
          %p190 = pneg %p60
        $region14: #{tpu_custom_call.1} parent=11 // pred_check_branch
          %192 = sbr.rel (%p190) target = $region16
        $region15: #{tpu_custom_call.1} parent=11 // pred_region
          _
        $region16: #{tpu_custom_call.1} parent=11 // pred_fallthru
          _
        // Predicated region
        $region17: #{tpu_custom_call.1} parent=11 // pred_check
          %p193 = pneg %p107
        $region18: #{tpu_custom_call.1} parent=11 // pred_check_branch
          %195 = sbr.rel (%p193) target = $region20
        $region19: #{tpu_custom_call.1} parent=11 // pred_region
          _
        $region20: #{tpu_custom_call.1} parent=11 // pred_fallthru
          _
        // Predicated region
        $region21: #{tpu_custom_call.1} parent=11 // pred_check
          %p196 = pneg %p154
        $region22: #{tpu_custom_call.1} parent=11 // pred_check_branch
          %198 = sbr.rel (%p196) target = $region24
        $region23: #{tpu_custom_call.1} parent=11 // pred_region
          _
        $region24: #{tpu_custom_call.1} parent=11 // pred_fallthru
          _
      $region12: #{tpu_custom_call.1} parent=5 // pred_fallthru
        _
      %p199 = scmp.lt.s32.totalorder %s13, 2
      // Predicated region
      $region25: #{tpu_custom_call.1} parent=5 // pred_check
        %p200 = pneg %p199
      $region26: #{tpu_custom_call.1} parent=5 // pred_check_branch
        %202 = sbr.rel (%p200) target = $region28
      $region27: #{tpu_custom_call.1} parent=5 // pred_region
        // Predicated region
        $region29: #{tpu_custom_call.1} parent=27 // pred_check
          %p203 = pneg %p33
        $region30: #{tpu_custom_call.1} parent=27 // pred_check_branch
          %205 = sbr.rel (%p203) target = $region32
        $region31: #{tpu_custom_call.1} parent=27 // pred_region
          %p206 = scmp.lt.s32.totalorder %s13, 1
          %s207 = scalar_select %p206, %s13, 1
          %s208 = smul.addr %s207, 8
          %s209 = scalar_lea.vmem %s0, %s208
        $region32: #{tpu_custom_call.1} parent=27 // pred_fallthru
          _
        // Predicated region
        $region33: #{tpu_custom_call.1} parent=27 // pred_check
          %p210 = pneg %p80
        $region34: #{tpu_custom_call.1} parent=27 // pred_check_branch
          %212 = sbr.rel (%p210) target = $region36
        $region35: #{tpu_custom_call.1} parent=27 // pred_region
          %p213 = scmp.lt.s32.totalorder %s13, 1
          %s214 = scalar_select %p213, %s13, 1
          %s215 = smul.addr %s214, 8
          %s216 = scalar_lea.vmem %s2, %s215
        $region36: #{tpu_custom_call.1} parent=27 // pred_fallthru
          _
        // Predicated region
        $region37: #{tpu_custom_call.1} parent=27 // pred_check
          %p217 = pneg %p127
        $region38: #{tpu_custom_call.1} parent=27 // pred_check_branch
          %219 = sbr.rel (%p217) target = $region40
        $region39: #{tpu_custom_call.1} parent=27 // pred_region
          %p220 = scmp.lt.s32.totalorder %s13, 1
          %s221 = scalar_select %p220, %s13, 1
          %s222 = smul.addr %s221, 8
          %s223 = scalar_lea.vmem %s4, %s222
        $region40: #{tpu_custom_call.1} parent=27 // pred_fallthru
          _
      $region28: #{tpu_custom_call.1} parent=5 // pred_fallthru
        _
      %p224 = scmp.le.s32.totalorder 1, %s13
      %p225 = scmp.lt.s32.totalorder %s13, 3
      %p226 = pnand %p224, %p225
      %p227 = pneg %p226
      // Predicated region
      $region41: #{tpu_custom_call.1} parent=5 // pred_check
        _
      $region42: #{tpu_custom_call.1} parent=5 // pred_check_branch
        %229 = sbr.rel (%p226) target = $region44
      $region43: #{tpu_custom_call.1} parent=5 // pred_region
        %s230 = ssub.s32 %s13, 1
        %p231 = scmp.lt.s32.totalorder %s18, 1
        %s232 = scalar_select %p231, %s18, 1
        %s233 = smul.addr %s232, 8
        %s234 = scalar_lea.vmem %s0, %s233
        %p235 = pneg %p39
        %p236 = pneg %p36
        %p237 = pneg %p60
        %p238 = pneg %p57
        %p239 = scmp.lt.s32.totalorder %s18, 1
        %s240 = scalar_select %p239, %s18, 1
        %s241 = smul.addr %s240, 8
        %s242 = scalar_lea.vmem %s2, %s241
        %p243 = pneg %p86
        %p244 = pneg %p83
        %p245 = pneg %p107
        %p246 = pneg %p104
        %p247 = scmp.lt.s32.totalorder %s18, 1
        %s248 = scalar_select %p247, %s18, 1
        %s249 = smul.addr %s248, 8
        %s250 = scalar_lea.vmem %s4, %s249
        %p251 = pneg %p133
        %p252 = pneg %p130
        %p253 = pneg %p154
        %p254 = pneg %p151
        %p255 = pneg %p175
        %p256 = pneg %p172
        %p257 = scmp.lt.s32.totalorder %s18, 1
        %s258 = scalar_select %p257, %s18, 1
        %s259 = smul.addr %s258, 8
        %s260 = scalar_lea.vmem %s0, %s259
        %p261 = scmp.lt.s32.totalorder %s18, 1
        %s262 = scalar_select %p261, %s18, 1
        %s263 = smul.addr %s262, 8
        %s264 = scalar_lea.vmem %s2, %s263
        %p265 = scmp.lt.s32.totalorder %s18, 1
        %s266 = scalar_select %p265, %s18, 1
        %s267 = smul.addr %s266, 8
        %s268 = scalar_lea.vmem %s4, %s267
        %p269 = scmp.eq.s32.totalorder %s18, 0
        // Predicated region
        $region45: #{tpu_custom_call.1} parent=43 // pred_check
          %p270 = pneg %p269
        $region46: #{tpu_custom_call.1} parent=43 // pred_check_branch
          %272 = sbr.rel (%p270) target = $region48
        $region47: #{tpu_custom_call.1} parent=43 // pred_region
          %s273 = scalar_lea.smem [#allocation3], 0
          %274 = sst [smem:[%s273]] 0.0
        $region48: #{tpu_custom_call.1} parent=43 // pred_fallthru
          _
        %v275 = vld [vmem:[%s260] sm:$0xff]
        %v276 = vld [vmem:[%s1] sm:$0xff]
        %v277 = vld [vmem:[%s1 + $0x8] sm:$0xff]
        %v278 = vld [vmem:[%s264] sm:$0xff]
        %v279 = vld [vmem:[%s3] sm:$0x1]
        %v280 = vld [vmem:[%s268] sm:$0xff]
        %v281 = vld [vmem:[%s5] sm:$0x1]
        %282 = vset.pattern.permute.xlu0 0
        %283 = vperm.xlu0 %282, %v280
        %v284 = vpop.permute.xlu0 %283
        %v285 = vperm.slane %v281, 0
        %vm286 = vcmp.eq.s32.totalorder %v284, %v285
        %vm287 = vcmask 261120
        %v289 = vsel %vm287, %v275, 0
        %v292 = vsel %vm287, %v276, 0
        %v295 = vsel %vm287, %v277, 0
        %297 = vmatpush.xpose.msra.mxu0 0.0
        %298 = vmatpush.xpose.msra.mxu0 0.0
        %299 = vmatpush.xpose.msra.mxu0 0.0
        %300 = vmatpush.xpose.msra.mxu0 0.0
        %301 = vmatpush.xpose.msra.mxu0 0.0
        %302 = vmatpush.xpose.msra.mxu0 0.0
        %303 = vmatpush.xpose.msra.mxu0 0.0
        %304 = vmatpush.xpose.msra.mxu0 0.0
        %305 = vmatpush.xpose.msra.mxu0 0.0
        %306 = vmatpush.xpose.msra.mxu0 0.0
        %307 = vmatpush.xpose.msra.mxu0 0.0
        %308 = vmatpush.xpose.msra.mxu0 0.0
        %309 = vmatpush.xpose.msra.mxu0 0.0
        %310 = vmatpush.xpose.msra.mxu0 0.0
        %311 = vmatpush.xpose.msra.mxu0 %v295
        %312 = vmatpush.xpose.msra.mxu0 %v292
        %313 = vmatmul.f32.gmra.mxu0 %v289
        %v314 = vpop.f32.mrf.mxu0
        %v315 = vadd.f32 0.2, %v314
        %316 = vdwg.mxu0
        %318 = vset.pattern.permute.xlu0 0
        %319 = vperm.xlu0 %318, %v278
        %v320 = vpop.permute.xlu0 %319
        %v322 = vsub.f32 %v315, %v320
        %v323 = vmax.f32 %v322, 0.0
        %v324 = vsel %vm286, 0.0, %v323
        %v326 = vperm.slane %v279, 0
        %v328 = vsub.f32 %v315, %v326
        %v329 = vmax.f32 %v328, 0.0
        %v330 = vsel %vm286, 0.0, %v329
        %s331 = sld [smem:[#allocation3]]
        %vm332 = vcmask 130048
        %v333 = vsel %vm332, %v324, 0.0
        %334 = vadd.xlane.f32.xlu0 %v333
        %v335 = vpop.xlane.xlu0 %334
        %v336 = vrot.slane %v335, 4
        %v337 = vadd.f32 %v335, %v336
        %v338 = vrot.slane %v337, 2
        %v339 = vadd.f32 %v337, %v338
        %v340 = vrot.slane %v339, 1
        %v341 = vadd.f32 %v339, %v340
        %s342 = vtos %v341
        %v343 = vsel %vm332, %v330, 0.0
        %344 = vadd.xlane.f32.xlu0 %v343
        %v345 = vpop.xlane.xlu0 %344
        %v346 = vrot.slane %v345, 4
        %v347 = vadd.f32 %v345, %v346
        %v348 = vrot.slane %v347, 2
        %v349 = vadd.f32 %v347, %v348
        %v350 = vrot.slane %v349, 1
        %v351 = vadd.f32 %v349, %v350
        %s352 = vtos %v351
        %s353 = sadd.f32 %s342, %s352
        %s354 = sadd.f32 %s331, %s353
        %s355 = scalar_lea.smem [#allocation3], 0
        %356 = sst [smem:[%s355]] %s354
        // Predicated region
        $region49: #{tpu_custom_call.1} parent=43 // pred_check
          %p357 = pneg %p172
        $region50: #{tpu_custom_call.1} parent=43 // pred_check_branch
          %359 = sbr.rel (%p357) target = $region52
        $region51: #{tpu_custom_call.1} parent=43 // pred_region
          %361 = vsyncadd [#allocation4], 0
          %s363 = sshll.u32 %s6, 4
          %s364 = int_to_ptr.hbm [resolvable:$true] %s363
          %366 = dma.smem_to_hbm [#allocation3], 16, %s364, [#allocation4]
        $region52: #{tpu_custom_call.1} parent=43 // pred_fallthru
          _
        // Predicated region
        $region53: #{tpu_custom_call.1} parent=43 // pred_check
          %p367 = pneg %p172
        $region54: #{tpu_custom_call.1} parent=43 // pred_check_branch
          %369 = sbr.rel (%p367) target = $region56
        $region55: #{tpu_custom_call.1} parent=43 // pred_region
          %371 = dma.done [#allocation4], 16
        $region56: #{tpu_custom_call.1} parent=43 // pred_fallthru
          _
        %372 = sfence
      $region44: #{tpu_custom_call.1} parent=5 // pred_fallthru
        _
      %p373 = scmp.le.s32.totalorder 2, %s13
      // Predicated region
      $region57: #{tpu_custom_call.1} parent=5 // pred_check
        %p374 = pneg %p373
      $region58: #{tpu_custom_call.1} parent=5 // pred_check_branch
        %376 = sbr.rel (%p374) target = $region60
      $region59: #{tpu_custom_call.1} parent=5 // pred_region
        %s377 = ssub.s32 %s13, 2
      $region60: #{tpu_custom_call.1} parent=5 // pred_fallthru
        _
    $region6: #{tpu_custom_call.1} parent=1 // loop_footer
      %s17 = sadd.s32 1, %s13
    $region7: #{tpu_custom_call.1} parent=1 // loop_footer_branch
      %12 = sbr.rel target = $region3
    $region8: #{tpu_custom_call.1} parent=1 // loop_exit
      _
    %378 = vsyncpa [#allocation4], 1
    %s379 = scalar_lea.sflag [#allocation4], 1
    %380 = vsyncpa %s379, 1

</llo_original>
